<compile_context>
chip_gen: v7x
topology: tpu7x:2x2x1
jax: 0.10.0
libtpu: 0.0.40
codegen_flags: <defaults>
</compile_context>

<pallas_src>
import jax
import jax.numpy as jnp
from jax.experimental import pallas as pl
from jax.experimental.pallas import tpu as pltpu


def _round_up(a: int, b: int) -> int:
    return ((a + b - 1) // b) * b


def _target_block_bytes() -> int:
    """Bytes per direction per grid step, sized per TPU generation."""
    try:
        kind = jax.devices()[0].device_kind.lower()
    except Exception:
        return 2 << 20
    if "v6" in kind or "v7" in kind:
        # 32 MiB scoped-VMEM default: 4 MiB blocks -> 16 MiB double-buffered.
        return 4 << 20
    # v5e & older / unknown: 16 MiB scoped default -> keep blocks at 2 MiB.
    return 2 << 20


def _sine_kernel(w0_ref, x_ref, o_ref):
    # Compute in f32 regardless of I/O dtype (v5e has no bf16 VPU/EUP);
    # the casts are no-ops for f32 inputs.
    x = x_ref[...].astype(jnp.float32)
    w0 = w0_ref[0]
    o_ref[...] = jnp.sin(w0 * x).astype(o_ref.dtype)


def sine_pallas(x: jax.Array, w0=1.0, *, lanes: int = 128) -> jax.Array:
    """Elementwise sin(w0 * x) for an arbitrary-shaped array via Pallas."""
    if lanes % 128 != 0:
        raise ValueError("lanes must be a multiple of 128")

    orig_shape = x.shape

    # torch.sin promotes integer inputs to floating point; f64 has no TPU
    # support -> compute/store those in f32.  f32/bf16/f16 keep their dtype.
    if jnp.issubdtype(x.dtype, jnp.floating) and jnp.dtype(x.dtype).itemsize <= 4:
        io_dtype = x.dtype
    else:
        io_dtype = jnp.float32

    xf = x.astype(io_dtype).reshape(-1)
    n = xf.shape[0]
    if n == 0:
        return jnp.zeros(orig_shape, io_dtype)

    itemsize = jnp.dtype(io_dtype).itemsize
    row_quantum = max(8, 32 // itemsize)          # sublanes: 8 f32, 16 bf16/f16
    tile_rows = max(row_quantum,
                    _round_up(_target_block_bytes() // (lanes * itemsize),
                              row_quantum))

    # Lane-dense 2-D slab [rows, lanes]; pad only to a multiple of `lanes`.
    # rows need NOT hit the sublane quantum: the (8/16,128) constraint lives
    # on block_shape, and partial final row-tiles are handled by the grid.
    rows = pl.cdiv(n, lanes)
    n_padded = rows * lanes
    if n_padded != n:
        xf = jnp.pad(xf, (0, n_padded - n))        # zero-pad is benign for sin
    x2d = xf.reshape(rows, lanes)

    if rows <= tile_rows:
        if rows >= 2 * row_quantum:
            # >= 2 grid steps so both v7x TensorCores get work.
            tr = _round_up(pl.cdiv(rows, 2), row_quantum)
        else:
            tr = rows                              # single block == full dim
    else:
        tr = tile_rows
    grid = (pl.cdiv(rows, tr),)

    # Scalar w0 lives in SMEM: works for traced values, no retrace per value.
    w0_arr = jnp.asarray(w0, dtype=jnp.float32).reshape((1,))

    out2d = pl.pallas_call(
        _sine_kernel,
        out_shape=jax.ShapeDtypeStruct((rows, lanes), io_dtype),
        grid_spec=pltpu.PrefetchScalarGridSpec(
            num_scalar_prefetch=0,
            grid=grid,
            in_specs=[
                pl.BlockSpec(memory_space=pltpu.MemorySpace.SMEM),   # w0
                pl.BlockSpec((tr, lanes), lambda i: (i, 0)),         # x tile
            ],
            out_specs=pl.BlockSpec((tr, lanes), lambda i: (i, 0)),
        ),
        compiler_params=pltpu.CompilerParams(
            dimension_semantics=("parallel",),     # v7x: shard grid across 2 TCs
        ),
    )(w0_arr, x2d)

    if n_padded != n:
        return out2d.reshape(-1)[:n].reshape(orig_shape)
    return out2d.reshape(orig_shape)


if __name__ == "__main__":
    key = jax.random.PRNGKey(0)

    # Main check: small NCHW f32 input, default w0 (lane-aligned, no padding).
    x = jax.random.normal(key, (2, 4, 16, 16), dtype=jnp.float32)
    w0 = 1.0
    y = sine_pallas(x, w0)
    jax.block_until_ready(y)
    y_ref = jnp.sin(w0 * x)
    assert y.shape == x.shape and y.dtype == x.dtype
    assert jnp.allclose(y, y_ref, atol=1e-6, rtol=1e-6)

    # Secondary check: bf16 I/O path (no f32 upcast in the wrapper), SIREN w0.
    key2 = jax.random.PRNGKey(1)
    xb = jax.random.normal(key2, (4, 8, 32, 32), dtype=jnp.bfloat16)
    w0b = 30.0
    yb = sine_pallas(xb, w0b)
    jax.block_until_ready(yb)
    yb_ref = jnp.sin(w0b * xb.astype(jnp.float32)).astype(jnp.bfloat16)
    assert yb.shape == xb.shape and yb.dtype == xb.dtype
    assert jnp.allclose(yb.astype(jnp.float32), yb_ref.astype(jnp.float32),
                        atol=2e-2, rtol=2e-2)

    # Third check: unaligned size (exercises the pad path) with a traced w0
    # under jit (exercises the SMEM-scalar path; no retrace per w0 value).
    key3 = jax.random.PRNGKey(2)
    xc = jax.random.normal(key3, (3, 5, 7), dtype=jnp.float32)
    w0c = jnp.float32(2.5)
    yc = jax.jit(sine_pallas)(xc, w0c)
    jax.block_until_ready(yc)
    yc_ref = jnp.sin(w0c * xc)
    assert yc.shape == xc.shape and yc.dtype == xc.dtype
    assert jnp.allclose(yc, yc_ref, atol=1e-6, rtol=1e-6)

    print("KERNEL_OK")
</pallas_src>

<mosaic_0001>
module attributes {stable_mosaic.version = 11 : i64} {
  func.func @_sine_kernel(%arg0: i32, %arg1: memref<1xf32, #tpu.memory_space<smem>>, %arg2: memref<8x128xf32, #tpu.memory_space<vmem>>, %arg3: memref<8x128xf32, #tpu.memory_space<vmem>>) attributes {dimension_semantics = [#tpu.dimension_semantics<parallel>], iteration_bounds = array<i64: 2>, scalar_prefetch = 0 : i64, scratch_operands = 0 : i64, tpu.core_type = #tpu.core_type<tc>, window_params = [{transform_indices = @transform_0, window_bounds = array<i64: 1>}, {transform_indices = @transform_1, window_bounds = array<i64: 8, 128>}, {transform_indices = @transform_2, window_bounds = array<i64: 8, 128>}]} {
    %c0 = arith.constant 0 : index
    %c0_0 = arith.constant 0 : index
    %0 = vector.load %arg2[%c0, %c0_0] : memref<8x128xf32, #tpu.memory_space<vmem>>, vector<8x128xf32>
    %c0_1 = arith.constant 0 : index
    %1 = memref.load %arg1[%c0_1] : memref<1xf32, #tpu.memory_space<smem>>
    %2 = vector.broadcast %1 : f32 to vector<8x128xf32>
    %3 = arith.mulf %2, %0 : vector<8x128xf32>
    %4 = math.sin %3 : vector<8x128xf32>
    %c0_2 = arith.constant 0 : index
    %c0_3 = arith.constant 0 : index
    %5 = vector.load %arg3[%c0_2, %c0_3] : memref<8x128xf32, #tpu.memory_space<vmem>>, vector<8x128xf32>
    tpu.vector_store %arg3[%c0_2, %c0_3], %4 {strides = array<i32>} : memref<8x128xf32, #tpu.memory_space<vmem>>, vector<8x128xf32>,
    return
  }
  func.func @transform_0(%arg0: i32) -> i32 {
    %c0_i32 = arith.constant 0 : i32
    %c0_i32_0 = arith.constant 0 : i32
    return %c0_i32 : i32
  }
  func.func @transform_1(%arg0: i32) -> (i32, i32) {
    %c0_i32 = arith.constant 0 : i32
    %c0_i32_0 = arith.constant 0 : i32
    return %arg0, %c0_i32 : i32, i32
  }
  func.func @transform_2(%arg0: i32) -> (i32, i32) {
    %c0_i32 = arith.constant 0 : i32
    %c0_i32_0 = arith.constant 0 : i32
    return %arg0, %c0_i32 : i32, i32
  }
}

</mosaic_0001>

<llo_original>
// kernel: tpu_custom_call.1
$region0: #{tpu_custom_call.1}
  #allocation0 [shape = 'u32[]', space=smem, size = 0x4, offset = 0x4, fixed_abs, tag = 'smem constant byte address 0x4 - core index']
  #allocation1 [shape = 'u32[144,128]{1,0:T(1,128)}', space=vmem, size = 0x12000, scoped, tag = 'internal scratch']
  #allocation2 [shape = 'f32[1]{0:T(128)S(6)}', space=smem, size = 0x200, scoped, tag = 'scoped memory for tpu_custom_call.1']
  %s0 = inlined_call_operand.<no memory space> [shape: f32[1], index: 0, kind: input, shape index: {}]
  %s1 = inlined_call_operand.hbm [shape: f32[16,128], index: 1, kind: input, shape index: {}]
  %s2 = inlined_call_operand.hbm [shape: f32[16,128], index: 2, kind: output, shape index: {}]
  %s3 = sld [smem:[#allocation0]]
  $region45: #{tpu_custom_call.1} parent=0
    _
  %s5 = ssub.s32 1, %s3
  %s6 = scalar_select 0, %s5, %s3
  %7 = sst [smem:[#allocation2]] %s0
  $region1: #{tpu_custom_call.1} parent=0
    #allocation3 [shape = 'u8[8192]{0}', space=vmem, size = 0x2000, scoped, tag = 'input window, operand 1']
    #allocation4 [shape = 's32[2]{0}', space=sflag, size = 0x8, scoped, tag = 'scoped memory for tpu_custom_call.1']
    #allocation5 [shape = 's32[2]{0}', space=sflag, size = 0x8, scoped, tag = 'scoped memory for tpu_custom_call.1']
    #allocation6 [shape = 'u8[8192]{0}', space=vmem, size = 0x2000, scoped, tag = 'output window, operand 0']
    %8 = vsyncpa [#allocation4], 0
    %s9 = scalar_lea.sflag [#allocation4], 1
    %10 = vsyncpa %s9, 0
    %11 = vsyncpa [#allocation5], 0
    %s12 = scalar_lea.sflag [#allocation5], 1
    %13 = vsyncpa %s12, 0
    loop: start=0, step=1, limit=4
    $region2: #{tpu_custom_call.1} parent=1 // loop_pre_header
      _
    $region3: #{tpu_custom_call.1} parent=1 // loop_header
      %s15 = sphi 0, %s19
      %p16 = scmp.ge.s32.totalorder %s15, 4
      %s23 = sphi 0, %s23
      %s25 = sphi 0, %s23
      %s26 = sphi 0, %s25
      %s40 = sphi 0, %s26
      %s46 = sphi 0, %s48
      %s49 = sphi 0, %s46
      %s50 = sphi 0, %s49
      %s66 = sphi 0, %s50
      %s72 = sphi 0, %s74
      %s75 = sphi 0, %s72
      %s76 = sphi 0, %s75
      %s92 = sphi 0, %s76
    $region4: #{tpu_custom_call.1} parent=1 // loop_header_branch
      %18 = sbr.rel (%p16) target = $region8
    $region5: #{tpu_custom_call.1} parent=1 // loop_body
      %s20 = ssub.s32 %s15, 1
      %s21 = ssub.s32 %s15, 2
      %s22 = sadd.s32 %s15, 1
      %s24 = sadd.s32 %s23, 1
      %p27 = scmp.eq.s32.totalorder %s15, 1
      %p28 = scmp.ne.s32.totalorder %s23, %s25
      %p29 = scmp.eq.s32.totalorder %s15, 0
      %p30 = por %p28, %p29
      %p31 = scmp.ne.s32.totalorder %s23, %s25
      %p32 = scmp.eq.s32.totalorder %s20, 1
      %p33 = por %p31, %p32
      %p34 = scmp.ne.s32.totalorder %s25, %s26
      %p35 = scmp.eq.s32.totalorder %s20, 0
      %p36 = por %p34, %p35
      %p37 = scmp.ne.s32.totalorder %s25, %s26
      %p38 = scmp.eq.s32.totalorder %s21, 1
      %p39 = por %p37, %p38
      %p41 = scmp.ne.s32.totalorder %s26, %s40
      %p42 = scmp.eq.s32.totalorder %s21, 0
      %p43 = por %p41, %p42
      %s44 = ssub.s32 %s15, %s22
      %p45 = scmp.eq.s32.totalorder %s44, 0
      %s47 = sadd.s32 %s46, 1
      %s48 = scalar_select %p45, %s46, %s47
      %p51 = pneg %p45
      %p52 = scmp.eq.s32.totalorder %s15, 1
      %p53 = por %p51, %p52
      %p54 = scmp.ne.s32.totalorder %s46, %s49
      %p55 = scmp.eq.s32.totalorder %s15, 0
      %p56 = por %p54, %p55
      %p57 = scmp.ne.s32.totalorder %s46, %s49
      %p58 = scmp.eq.s32.totalorder %s20, 1
      %p59 = por %p57, %p58
      %p60 = scmp.ne.s32.totalorder %s49, %s50
      %p61 = scmp.eq.s32.totalorder %s20, 0
      %p62 = por %p60, %p61
      %p63 = scmp.ne.s32.totalorder %s49, %s50
      %p64 = scmp.eq.s32.totalorder %s21, 1
      %p65 = por %p63, %p64
      %p67 = scmp.ne.s32.totalorder %s50, %s66
      %p68 = scmp.eq.s32.totalorder %s21, 0
      %p69 = por %p67, %p68
      %s70 = ssub.s32 %s15, %s22
      %p71 = scmp.eq.s32.totalorder %s70, 0
      %s73 = sadd.s32 %s72, 1
      %s74 = scalar_select %p71, %s72, %s73
      %p77 = pneg %p71
      %p78 = scmp.eq.s32.totalorder %s15, 1
      %p79 = por %p77, %p78
      %p80 = scmp.ne.s32.totalorder %s72, %s75
      %p81 = scmp.eq.s32.totalorder %s15, 0
      %p82 = por %p80, %p81
      %p83 = scmp.ne.s32.totalorder %s72, %s75
      %p84 = scmp.eq.s32.totalorder %s20, 1
      %p85 = por %p83, %p84
      %p86 = scmp.ne.s32.totalorder %s75, %s76
      %p87 = scmp.eq.s32.totalorder %s20, 0
      %p88 = por %p86, %p87
      %p89 = scmp.ne.s32.totalorder %s75, %s76
      %p90 = scmp.eq.s32.totalorder %s21, 1
      %p91 = por %p89, %p90
      %p93 = scmp.ne.s32.totalorder %s76, %s92
      %p94 = scmp.eq.s32.totalorder %s21, 0
      %p95 = por %p93, %p94
      %p96 = scmp.le.s32.totalorder 1, %s15
      %p97 = scmp.lt.s32.totalorder %s15, 3
      %p98 = pnand %p96, %p97
      %p99 = pneg %p98
      // Predicated region
      $region9: #{tpu_custom_call.1} parent=5 // pred_check
        _
      $region10: #{tpu_custom_call.1} parent=5 // pred_check_branch
        %101 = sbr.rel (%p98) target = $region12
      $region11: #{tpu_custom_call.1} parent=5 // pred_region
        %s102 = ssub.s32 %s15, 1
        // Predicated region
        $region13: #{tpu_custom_call.1} parent=11 // pred_check
          %p103 = pneg %p36
        $region14: #{tpu_custom_call.1} parent=11 // pred_check_branch
          %105 = sbr.rel (%p103) target = $region16
        $region15: #{tpu_custom_call.1} parent=11 // pred_region
          _
        $region16: #{tpu_custom_call.1} parent=11 // pred_fallthru
          _
      $region12: #{tpu_custom_call.1} parent=5 // pred_fallthru
        _
      %p106 = scmp.lt.s32.totalorder %s15, 2
      // Predicated region
      $region17: #{tpu_custom_call.1} parent=5 // pred_check
        %p107 = pneg %p106
      $region18: #{tpu_custom_call.1} parent=5 // pred_check_branch
        %109 = sbr.rel (%p107) target = $region20
      $region19: #{tpu_custom_call.1} parent=5 // pred_region
        // Predicated region
        $region21: #{tpu_custom_call.1} parent=19 // pred_check
          %p110 = pneg %p56
        $region22: #{tpu_custom_call.1} parent=19 // pred_check_branch
          %112 = sbr.rel (%p110) target = $region24
        $region23: #{tpu_custom_call.1} parent=19 // pred_region
          %s113 = sand.u32 %s46, 1
          %s114 = scalar_lea.sflag [#allocation4], %s113
          %s115 = sand.u32 %s46, 1
          %s116 = smul.addr %s115, 8
          %s117 = scalar_lea.vmem [#allocation3], %s116
          %s119 = ssub.s32 128, 128
          %120 = vsyncadd %s114, %s119
          %s121 = smul.addr %s15, 128
          %s122 = scalar_lea.hbm %s1, %s121
          %s124 = sshll.u32 %s117, 4
          %s125 = int_to_ptr.vmem [resolvable:$true] %s124
          %127 = dma.hbm_to_vmem [thread:$0]  %s122, 128, %s125, %s114
        $region24: #{tpu_custom_call.1} parent=19 // pred_fallthru
          _
      $region20: #{tpu_custom_call.1} parent=5 // pred_fallthru
        _
      %p128 = scmp.le.s32.totalorder 1, %s15
      %p129 = scmp.lt.s32.totalorder %s15, 3
      %p130 = pnand %p128, %p129
      %p131 = pneg %p130
      // Predicated region
      $region25: #{tpu_custom_call.1} parent=5 // pred_check
        _
      $region26: #{tpu_custom_call.1} parent=5 // pred_check_branch
        %133 = sbr.rel (%p130) target = $region28
      $region27: #{tpu_custom_call.1} parent=5 // pred_region
        %s134 = ssub.s32 %s15, 1
        %s135 = sand.u32 %s49, 1
        %s136 = scalar_lea.sflag [#allocation4], %s135
        %s137 = sand.u32 %s49, 1
        %s138 = smul.addr %s137, 8
        %s139 = scalar_lea.vmem [#allocation3], %s138
        // Predicated region
        $region29: #{tpu_custom_call.1} parent=27 // pred_check
          %p140 = pneg %p62
        $region30: #{tpu_custom_call.1} parent=27 // pred_check_branch
          %142 = sbr.rel (%p140) target = $region32
        $region31: #{tpu_custom_call.1} parent=27 // pred_region
          %143 = dma.done %s136, 128
        $region32: #{tpu_custom_call.1} parent=27 // pred_fallthru
          _
        %p144 = pneg %p36
        %p145 = pneg %p33
        %s146 = sand.u32 %s49, 1
        %s147 = scalar_lea.sflag [#allocation4], %s146
        %s148 = sand.u32 %s49, 1
        %s149 = smul.addr %s148, 8
        %s150 = scalar_lea.vmem [#allocation3], %s149
        %p151 = pneg %p62
        %p152 = pneg %p59
        %p153 = pneg %p88
        %p154 = pneg %p85
        %s155 = sand.u32 %s75, 1
        %s156 = scalar_lea.sflag [#allocation5], %s155
        %s157 = sand.u32 %s75, 1
        %s158 = smul.addr %s157, 8
        %s159 = scalar_lea.vmem [#allocation6], %s158
        %v160 = vld [vmem:[%s139] sm:$0xff]
        %s161 = sld [smem:[#allocation2]]
        %v162 = vstv %s161
        %v163 = vmul.f32 %v162, %v160
        %v164 = vand.u32 2147483647, %v163
        %vm165 = vcmp.le.f32.partialorder %v164, 0.7853982
        %vm166 = vcmp.lt.s32.totalorder %v163, 0
        %v167 = vand.u32 %v163, 2139095040
        %v168 = vshrl.u32 %v167, 23
        %v169 = vsub.s32 %v168, 127
        %v170 = vand.u32 2147483647, %v163
        %v171 = vand.u32 %v170, 8388607
        %v172 = vor.u32 %v171, 8388608
        %v173 = vsub.s32 0, %v172
        %v174 = vadd.s32 %v169, 1
        %vm175 = vcmp.gt.s32.totalorder %v174, 0
        %v176 = vsel %vm175, %v174, 0
        %v177 = vshrl.u32 %v176, 5
        %v178 = vand.u32 %v176, 31
        %v179 = vsub.s32 32, %v178
        %v180 = vshrl.u32 683565275, %v179
        %v181 = vshll.u32 683565275, %v178
        %v182 = vshrl.u32 2475754826, %v179
        %v183 = vor.u32 %v181, %v182
        %v184 = vshll.u32 2475754826, %v178
        %v185 = vshrl.u32 2131351028, %v179
        %v186 = vor.u32 %v184, %v185
        %v187 = vshll.u32 2131351028, %v178
        %v188 = vshrl.u32 2102212464, %v179
        %v189 = vor.u32 %v187, %v188
        %v190 = vshll.u32 2102212464, %v178
        %v191 = vshrl.u32 920167782, %v179
        %v192 = vor.u32 %v190, %v191
        %v193 = vshll.u32 920167782, %v178
        %v194 = vshrl.u32 1326507024, %v179
        %v195 = vor.u32 %v193, %v194
        %vm196 = vcmp.lt.s32.totalorder %v177, 1
        %vm197 = vcmp.lt.s32.totalorder %v177, 2
        %vm198 = vcmp.lt.s32.totalorder %v177, 3
        %vm199 = vcmp.lt.s32.totalorder %v177, 4
        %v200 = vsel %vm196, %v180, %v183
        %v201 = vsel %vm199, %v189, 2102212464
        %v202 = vsel %vm198, %v186, %v201
        %v203 = vsel %vm197, %v200, %v202
        %v204 = vsel %vm196, %v183, %v186
        %v205 = vsel %vm199, %v192, 920167782
        %v206 = vsel %vm198, %v189, %v205
        %v207 = vsel %vm197, %v204, %v206
        %v208 = vsel %vm196, %v186, %v189
        %v209 = vsel %vm199, %v195, 1326507024
        %v210 = vsel %vm198, %v192, %v209
        %v211 = vsel %vm197, %v208, %v210
        %v212 = vshll.u32 %v172, 8
        %v213 = vmul.u32.u64.compose %v212, %v211
        %v214 = vextract.low.u32 %v213
        %v215 = vextract.high.u32 %v213
        %v216 = vmul.u32.u64.compose %v212, %v207
        %v217 = vextract.low.u32 %v216
        %v218 = vextract.high.u32 %v216
        %v219 = vmul.u32 %v212, %v203
        %v220 = vadd.s32 %v215, %v217
        %vm221 = vc.u32 %v215, %v217
        %v222 = vadd.s32 %v218, 1
        %v223 = vsel %vm221, %v222, %v218
        %v224 = vadd.s32 %v219, %v223
        %v225 = vadd.s32 %v224, 536870912
        %v226 = vshrl.u32 %v225, 30
        %v227 = vshll.u32 %v226, 30
        %v228 = vsub.s32 %v224, %v227
        %vm229 = vcmp.lt.s32.totalorder %v228, 0
        %v230 = vsub.s32 0, %v228
        %v231 = vsel %vm229, %v230, %v228
        %v232 = vclz %v231
        %v233 = vsub.s32 %v232, 2
        %vm234 = vcmp.gt.s32.totalorder 0, %v233
        %v235 = vsel %vm234, 0, %v233
        %v236 = vsub.s32 32, %v235
        %v237 = vshll.u32 %v228, %v235
        %v238 = vshrl.u32 %v220, %v236
        %v239 = vor.u32 %v237, %v238
        %v240 = vsub.s32 4294967266, %v235
        %v241 = vadd.s32 %v240, 127
        %v242 = vshll.u32 %v241, 23
        %v243 = vor.u32 4788187, %v242
        %v244 = vand.u32 2147483647, %v243
        %v246 = vcvt.s32.f32 %v239
        %v247 = vmul.f32 %v246, %v244
        %v248 = vxor.u32 %v247, 2147483648
        %v249 = vsel %vm166, %v248, %v247
        %v250 = vsub.s32 4, %v226
        %v251 = vsel %vm166, %v250, %v226
        %v252 = vsel %vm165, %v163, %v249
        %v253 = vsel %vm165, 0, %v251
        %v254 = vcosq.f32.pop %v252
        %v255 = vsinq.f32.pop %v252
        %vm256 = vweird.f32 %v163
        %v257 = vadd.s32 %v253, 3
        %v258 = vand.u32 %v257, 3
        %vm259 = vcmp.lt.s32.totalorder %v258, 2
        %vm260 = vcmp.eq.s32.totalorder %v258, 0
        %v261 = vxor.u32 %v255, 2147483648
        %v262 = vsel %vm260, %v254, %v261
        %vm263 = vcmp.eq.s32.totalorder %v258, 2
        %v264 = vxor.u32 %v254, 2147483648
        %v265 = vsel %vm263, %v264, %v255
        %v266 = vsel %vm259, %v262, %v265
        %v267 = vsel %vm256, nan, %v266
        %268 = vst [vmem:[%s159] sm:$0xff] %v267
        %s269 = sand.u32 %s75, 1
        %s270 = scalar_lea.sflag [#allocation5], %s269
        %s271 = sand.u32 %s75, 1
        %s272 = smul.addr %s271, 8
        %s273 = scalar_lea.vmem [#allocation6], %s272
        // Predicated region
        $region33: #{tpu_custom_call.1} parent=27 // pred_check
          %p274 = pneg %p85
        $region34: #{tpu_custom_call.1} parent=27 // pred_check_branch
          %276 = sbr.rel (%p274) target = $region36
        $region35: #{tpu_custom_call.1} parent=27 // pred_region
          %s278 = ssub.s32 128, 128
          %279 = vsyncadd %s270, %s278
          %s280 = smul.addr %s20, 128
          %s281 = scalar_lea.hbm %s2, %s280
          %s283 = sshll.u32 %s273, 4
          %s284 = int_to_ptr.vmem [resolvable:$true] %s283
          %286 = dma.vmem_to_hbm [thread:$0]  %s284, 128, %s281, %s270
        $region36: #{tpu_custom_call.1} parent=27 // pred_fallthru
          _
      $region28: #{tpu_custom_call.1} parent=5 // pred_fallthru
        _
      %p287 = scmp.le.s32.totalorder 2, %s15
      // Predicated region
      $region37: #{tpu_custom_call.1} parent=5 // pred_check
        %p288 = pneg %p287
      $region38: #{tpu_custom_call.1} parent=5 // pred_check_branch
        %290 = sbr.rel (%p288) target = $region40
      $region39: #{tpu_custom_call.1} parent=5 // pred_region
        %s291 = ssub.s32 %s15, 2
        // Predicated region
        $region41: #{tpu_custom_call.1} parent=39 // pred_check
          %p292 = pneg %p91
        $region42: #{tpu_custom_call.1} parent=39 // pred_check_branch
          %294 = sbr.rel (%p292) target = $region44
        $region43: #{tpu_custom_call.1} parent=39 // pred_region
          %s295 = sand.u32 %s76, 1
          %s296 = scalar_lea.sflag [#allocation5], %s295
          %s297 = sand.u32 %s76, 1
          %s298 = smul.addr %s297, 8
          %s299 = scalar_lea.vmem [#allocation6], %s298
          %300 = dma.done %s296, 128
        $region44: #{tpu_custom_call.1} parent=39 // pred_fallthru
          _
      $region40: #{tpu_custom_call.1} parent=5 // pred_fallthru
        _
    $region6: #{tpu_custom_call.1} parent=1 // loop_footer
      %s19 = sadd.s32 1, %s15
    $region7: #{tpu_custom_call.1} parent=1 // loop_footer_branch
      %14 = sbr.rel target = $region3
    $region8: #{tpu_custom_call.1} parent=1 // loop_exit
      _
    %301 = vsyncpa [#allocation4], 1
    %s302 = scalar_lea.sflag [#allocation4], 1
    %303 = vsyncpa %s302, 1
    %304 = vsyncpa [#allocation5], 1
    %s305 = scalar_lea.sflag [#allocation5], 1
    %306 = vsyncpa %s305, 1

</llo_original>
